<compile_context>
chip_gen: v7x
topology: tpu7x:2x2x1
jax: 0.10.0
libtpu: 0.0.40
codegen_flags: <defaults>
</compile_context>

<pallas_src>
import jax
import jax.numpy as jnp
from jax.experimental import pallas as pl
from jax.experimental.pallas import tpu as pltpu


def _round_up(x, m):
    return ((x + m - 1) // m) * m


def _mlp_kernel(x_ref, w1_ref, b1_ref, w2_ref, b2_ref, w3_ref, b3_ref, o_ref):
    # In-kernel cast of the activation tile to bf16 (MXU operand format).
    x = x_ref[...].astype(jnp.bfloat16)

    # fc1 + ReLU  (bf16 operands, f32 accumulate/bias)
    h1 = jnp.dot(x, w1_ref[...], preferred_element_type=jnp.float32)
    h1 = jnp.maximum(h1 + b1_ref[...], 0.0).astype(jnp.bfloat16)

    # fc2 + ReLU
    h2 = jnp.dot(h1, w2_ref[...], preferred_element_type=jnp.float32)
    h2 = jnp.maximum(h2 + b2_ref[...], 0.0).astype(jnp.bfloat16)

    # fc3 (no activation), f32 output
    out = jnp.dot(h2, w3_ref[...], preferred_element_type=jnp.float32)
    o_ref[...] = (out + b3_ref[...]).astype(o_ref.dtype)


def _pick_tile(B, tile_b):
    """Batch tile: multiple of 8, amortizes per-step overhead, >=2 grid steps
    when the batch is large enough (so v7x can shard across its 2 TCs)."""
    if B < 8:
        return B  # equals full array dim -> legal BlockSpec
    bt = min(tile_b, _round_up(B, 8))
    if B <= bt:
        half = _round_up(pl.cdiv(B, 2), 8)
        if half >= 128:
            bt = half
    return bt


def _mlp_forward_impl(x, w1, b1, w2, b2, w3, b3, *, tile_b=1024):
    """Fused MLP forward. x: (B, status_size) f32 -> (B, actions_size) f32.

    Weights are expected pre-converted by prepare_params() (bf16 weights,
    f32 (1, F) biases) so the pallas_call is the only device op per call.
    """
    B, S = x.shape
    F1 = w1.shape[1]
    F2 = w2.shape[1]
    A = w3.shape[1]

    bt = _pick_tile(B, tile_b)
    grid = (pl.cdiv(B, bt),)

    in_specs = [
        pl.BlockSpec((bt, S), lambda i: (i, 0)),    # x tile (batch-pipelined)
        pl.BlockSpec((S, F1), lambda i: (0, 0)),    # w1 (resident in VMEM)
        pl.BlockSpec((1, F1), lambda i: (0, 0)),    # b1
        pl.BlockSpec((F1, F2), lambda i: (0, 0)),   # w2
        pl.BlockSpec((1, F2), lambda i: (0, 0)),    # b2
        pl.BlockSpec((F2, A), lambda i: (0, 0)),    # w3 (narrow N, no padding)
        pl.BlockSpec((1, A), lambda i: (0, 0)),     # b3
    ]
    out_spec = pl.BlockSpec((bt, A), lambda i: (i, 0))

    return pl.pallas_call(
        _mlp_kernel,
        out_shape=jax.ShapeDtypeStruct((B, A), jnp.float32),
        grid=grid,
        in_specs=in_specs,
        out_specs=out_spec,
        compiler_params=pltpu.CompilerParams(
            dimension_semantics=("parallel",),  # v7x: shard batch over 2 TCs
        ),
    )(x, w1, b1, w2, b2, w3, b3)


mlp_forward = jax.jit(_mlp_forward_impl, static_argnames=("tile_b",))


def prepare_params(w1, b1, w2, b2, w3, b3):
    """One-time conversion to kernel dtypes (hoisted out of the forward path)."""
    return (
        w1.astype(jnp.bfloat16), b1.astype(jnp.float32),
        w2.astype(jnp.bfloat16), b2.astype(jnp.float32),
        w3.astype(jnp.bfloat16), b3.astype(jnp.float32),
    )


def init_params(key, status_size, fc1_size, fc2_size, actions_size):
    """Deterministic parameter init (uniform, PyTorch-Linear-like fan_in scaling)."""
    ks = jax.random.split(key, 6)

    def linear(kw, kb, fan_in, fan_out):
        bound = 1.0 / jnp.sqrt(fan_in)
        # stored as (in, out) so the kernel does x @ W
        w = jax.random.uniform(kw, (fan_in, fan_out), jnp.float32, -bound, bound)
        b = jax.random.uniform(kb, (1, fan_out), jnp.float32, -bound, bound)
        return w, b

    w1, b1 = linear(ks[0], ks[1], status_size, fc1_size)
    w2, b2 = linear(ks[2], ks[3], fc1_size, fc2_size)
    w3, b3 = linear(ks[4], ks[5], fc2_size, actions_size)
    return w1, b1, w2, b2, w3, b3


def _reference_forward(x, w1, b1, w2, b2, w3, b3):
    """Pure-JAX reference with the same bf16-operand / f32-accumulate recipe."""
    h1 = jnp.dot(x.astype(jnp.bfloat16), w1.astype(jnp.bfloat16),
                 preferred_element_type=jnp.float32) + b1
    h1 = jnp.maximum(h1, 0.0)
    h2 = jnp.dot(h1.astype(jnp.bfloat16), w2.astype(jnp.bfloat16),
                 preferred_element_type=jnp.float32) + b2
    h2 = jnp.maximum(h2, 0.0)
    return jnp.dot(h2.astype(jnp.bfloat16), w3.astype(jnp.bfloat16),
                   preferred_element_type=jnp.float32) + b3


if __name__ == "__main__":
    cfg = {
        "status_size": 32,
        "model_fc1_size": 64,
        "model_fc2_size": 64,
        "actions_size": 16,
    }

    key = jax.random.PRNGKey(0)
    k_x1, k_x2, k_x3, k_p = jax.random.split(key, 4)

    params_f32 = init_params(
        k_p,
        cfg["status_size"],
        cfg["model_fc1_size"],
        cfg["model_fc2_size"],
        cfg["actions_size"],
    )
    # Hoisted, one-time conversion to kernel dtypes.
    params = prepare_params(*params_f32)

    # batch=8   : single grid step, tiny-batch latency path
    # batch=300 : ragged last block + >=2 grid steps (v7x split path)
    # batch=4096: multiple full 1024-row tiles
    for k_x, batch in ((k_x1, 8), (k_x2, 300), (k_x3, 4096)):
        x = jax.random.normal(k_x, (batch, cfg["status_size"]), jnp.float32)

        out = mlp_forward(x, *params)
        jax.block_until_ready(out)

        ref = _reference_forward(x, *params_f32)
        assert out.shape == (batch, cfg["actions_size"])
        assert jnp.allclose(out, ref, atol=2e-2, rtol=2e-2), (
            float(jnp.max(jnp.abs(out - ref)))
        )

    print("KERNEL_OK")
</pallas_src>

<mosaic_0001>
module attributes {stable_mosaic.version = 11 : i64} {
  func.func @_mlp_kernel(%arg0: i32, %arg1: memref<8x32xf32, #tpu.memory_space<vmem>>, %arg2: memref<32x64xbf16, #tpu.memory_space<vmem>>, %arg3: memref<1x64xf32, #tpu.memory_space<vmem>>, %arg4: memref<64x64xbf16, #tpu.memory_space<vmem>>, %arg5: memref<1x64xf32, #tpu.memory_space<vmem>>, %arg6: memref<64x16xbf16, #tpu.memory_space<vmem>>, %arg7: memref<1x16xf32, #tpu.memory_space<vmem>>, %arg8: memref<8x16xf32, #tpu.memory_space<vmem>>) attributes {dimension_semantics = [#tpu.dimension_semantics<parallel>], iteration_bounds = array<i64: 1>, scalar_prefetch = 0 : i64, scratch_operands = 0 : i64, tpu.core_type = #tpu.core_type<tc>, window_params = [{transform_indices = @transform_0, window_bounds = array<i64: 8, 32>}, {pipeline_mode = #tpu.pipeline_mode<synchronous>, transform_indices = @transform_1, window_bounds = array<i64: 32, 64>}, {pipeline_mode = #tpu.pipeline_mode<synchronous>, transform_indices = @transform_2, window_bounds = array<i64: 1, 64>}, {pipeline_mode = #tpu.pipeline_mode<synchronous>, transform_indices = @transform_3, window_bounds = array<i64: 64, 64>}, {pipeline_mode = #tpu.pipeline_mode<synchronous>, transform_indices = @transform_4, window_bounds = array<i64: 1, 64>}, {pipeline_mode = #tpu.pipeline_mode<synchronous>, transform_indices = @transform_5, window_bounds = array<i64: 64, 16>}, {pipeline_mode = #tpu.pipeline_mode<synchronous>, transform_indices = @transform_6, window_bounds = array<i64: 1, 16>}, {transform_indices = @transform_7, window_bounds = array<i64: 8, 16>}]} {
    %c0 = arith.constant 0 : index
    %c0_0 = arith.constant 0 : index
    %0 = vector.load %arg1[%c0, %c0_0] : memref<8x32xf32, #tpu.memory_space<vmem>>, vector<8x32xf32>
    %1 = arith.truncf %0 : vector<8x32xf32> to vector<8x32xbf16>
    %c0_1 = arith.constant 0 : index
    %c0_2 = arith.constant 0 : index
    %2 = vector.load %arg2[%c0_1, %c0_2] : memref<32x64xbf16, #tpu.memory_space<vmem>>, vector<32x64xbf16>
    %cst = arith.constant dense<0.000000e+00> : vector<8x64xf32>
    %3 = tpu.matmul %1, %2, %cst {dimension_numbers = #tpu.dot_dimension_numbers<[1], [0], [0], [1], [0, 0, 1, 1], [], []>} : vector<8x32xbf16>, vector<32x64xbf16>, vector<8x64xf32> -> vector<8x64xf32>
    %c0_3 = arith.constant 0 : index
    %c0_4 = arith.constant 0 : index
    %4 = vector.load %arg3[%c0_3, %c0_4] : memref<1x64xf32, #tpu.memory_space<vmem>>, vector<1x64xf32>
    %5 = vector.broadcast %4 : vector<1x64xf32> to vector<8x64xf32>
    %6 = arith.addf %3, %5 : vector<8x64xf32>
    %cst_5 = arith.constant 0.000000e+00 : f32
    %7 = vector.broadcast %cst_5 : f32 to vector<8x64xf32>
    %8 = arith.maximumf %6, %7 : vector<8x64xf32>
    %9 = arith.truncf %8 : vector<8x64xf32> to vector<8x64xbf16>
    %c0_6 = arith.constant 0 : index
    %c0_7 = arith.constant 0 : index
    %10 = vector.load %arg4[%c0_6, %c0_7] : memref<64x64xbf16, #tpu.memory_space<vmem>>, vector<64x64xbf16>
    %cst_8 = arith.constant dense<0.000000e+00> : vector<8x64xf32>
    %11 = tpu.matmul %9, %10, %cst_8 {dimension_numbers = #tpu.dot_dimension_numbers<[1], [0], [0], [1], [0, 0, 1, 1], [], []>} : vector<8x64xbf16>, vector<64x64xbf16>, vector<8x64xf32> -> vector<8x64xf32>
    %c0_9 = arith.constant 0 : index
    %c0_10 = arith.constant 0 : index
    %12 = vector.load %arg5[%c0_9, %c0_10] : memref<1x64xf32, #tpu.memory_space<vmem>>, vector<1x64xf32>
    %13 = vector.broadcast %12 : vector<1x64xf32> to vector<8x64xf32>
    %14 = arith.addf %11, %13 : vector<8x64xf32>
    %cst_11 = arith.constant 0.000000e+00 : f32
    %15 = vector.broadcast %cst_11 : f32 to vector<8x64xf32>
    %16 = arith.maximumf %14, %15 : vector<8x64xf32>
    %17 = arith.truncf %16 : vector<8x64xf32> to vector<8x64xbf16>
    %c0_12 = arith.constant 0 : index
    %c0_13 = arith.constant 0 : index
    %18 = vector.load %arg6[%c0_12, %c0_13] : memref<64x16xbf16, #tpu.memory_space<vmem>>, vector<64x16xbf16>
    %cst_14 = arith.constant dense<0.000000e+00> : vector<8x16xf32>
    %19 = tpu.matmul %17, %18, %cst_14 {dimension_numbers = #tpu.dot_dimension_numbers<[1], [0], [0], [1], [0, 0, 1, 1], [], []>} : vector<8x64xbf16>, vector<64x16xbf16>, vector<8x16xf32> -> vector<8x16xf32>
    %c0_15 = arith.constant 0 : index
    %c0_16 = arith.constant 0 : index
    %20 = vector.load %arg7[%c0_15, %c0_16] : memref<1x16xf32, #tpu.memory_space<vmem>>, vector<1x16xf32>
    %21 = vector.broadcast %20 : vector<1x16xf32> to vector<8x16xf32>
    %22 = arith.addf %19, %21 : vector<8x16xf32>
    %c0_17 = arith.constant 0 : index
    %c0_18 = arith.constant 0 : index
    %23 = vector.load %arg8[%c0_17, %c0_18] : memref<8x16xf32, #tpu.memory_space<vmem>>, vector<8x16xf32>
    tpu.vector_store %arg8[%c0_17, %c0_18], %22 {strides = array<i32>} : memref<8x16xf32, #tpu.memory_space<vmem>>, vector<8x16xf32>,
    return
  }
  func.func @transform_0(%arg0: i32) -> (i32, i32) {
    %c0_i32 = arith.constant 0 : i32
    %c0_i32_0 = arith.constant 0 : i32
    return %arg0, %c0_i32 : i32, i32
  }
  func.func @transform_1(%arg0: i32) -> (i32, i32) {
    %c0_i32 = arith.constant 0 : i32
    %c0_i32_0 = arith.constant 0 : i32
    %c0_i32_1 = arith.constant 0 : i32
    return %c0_i32, %c0_i32_0 : i32, i32
  }
  func.func @transform_2(%arg0: i32) -> (i32, i32) {
    %c0_i32 = arith.constant 0 : i32
    %c0_i32_0 = arith.constant 0 : i32
    %c0_i32_1 = arith.constant 0 : i32
    return %c0_i32, %c0_i32_0 : i32, i32
  }
  func.func @transform_3(%arg0: i32) -> (i32, i32) {
    %c0_i32 = arith.constant 0 : i32
    %c0_i32_0 = arith.constant 0 : i32
    %c0_i32_1 = arith.constant 0 : i32
    return %c0_i32, %c0_i32_0 : i32, i32
  }
  func.func @transform_4(%arg0: i32) -> (i32, i32) {
    %c0_i32 = arith.constant 0 : i32
    %c0_i32_0 = arith.constant 0 : i32
    %c0_i32_1 = arith.constant 0 : i32
    return %c0_i32, %c0_i32_0 : i32, i32
  }
  func.func @transform_5(%arg0: i32) -> (i32, i32) {
    %c0_i32 = arith.constant 0 : i32
    %c0_i32_0 = arith.constant 0 : i32
    %c0_i32_1 = arith.constant 0 : i32
    return %c0_i32, %c0_i32_0 : i32, i32
  }
  func.func @transform_6(%arg0: i32) -> (i32, i32) {
    %c0_i32 = arith.constant 0 : i32
    %c0_i32_0 = arith.constant 0 : i32
    %c0_i32_1 = arith.constant 0 : i32
    return %c0_i32, %c0_i32_0 : i32, i32
  }
  func.func @transform_7(%arg0: i32) -> (i32, i32) {
    %c0_i32 = arith.constant 0 : i32
    %c0_i32_0 = arith.constant 0 : i32
    return %arg0, %c0_i32 : i32, i32
  }
}

</mosaic_0001>

<llo_original>
// kernel: _mlp_forward_impl.1
$region0: #{_mlp_forward_impl.1}
  #allocation0 [shape = 'u32[]', space=smem, size = 0x4, offset = 0x4, fixed_abs, tag = 'smem constant byte address 0x4 - core index']
  #allocation1 [shape = 'u32[144,128]{1,0:T(1,128)}', space=vmem, size = 0x12000, scoped, tag = 'internal scratch']
  %s0 = inlined_call_operand.hbm [shape: f32[8,32], index: 0, kind: input, shape index: {}]
  %s1 = inlined_call_operand.vmem [shape: bf16[32,64], index: 1, kind: input, shape index: {}]
  %s2 = inlined_call_operand.vmem [shape: f32[1,64], index: 2, kind: input, shape index: {}]
  %s3 = inlined_call_operand.vmem [shape: bf16[64,64], index: 3, kind: input, shape index: {}]
  %s4 = inlined_call_operand.vmem [shape: f32[1,64], index: 4, kind: input, shape index: {}]
  %s5 = inlined_call_operand.vmem [shape: bf16[64,16], index: 5, kind: input, shape index: {}]
  %s6 = inlined_call_operand.vmem [shape: f32[1,16], index: 6, kind: input, shape index: {}]
  %s7 = inlined_call_operand.hbm [shape: f32[8,16], index: 7, kind: output, shape index: {}]
  %s8 = sld [smem:[#allocation0]]
  $region42: #{_mlp_forward_impl.1} parent=0
    _
  %s10 = ssub.s32 1, %s8
  %s11 = scalar_select 0, %s10, %s8
  $region1: #{_mlp_forward_impl.1} parent=0
    #allocation2 [shape = 'u8[4096]{0}', space=vmem, size = 0x1000, scoped, tag = 'input window, operand 0, single buffered']
    #allocation3 [shape = 's32[1]{0}', space=sflag, size = 0x4, scoped, tag = 'scoped memory for _mlp_forward_impl.1']
    #allocation4 [shape = 's32[1]{0}', space=sflag, size = 0x4, scoped, tag = 'scoped memory for _mlp_forward_impl.1']
    #allocation5 [shape = 'u8[4096]{0}', space=vmem, size = 0x1000, scoped, tag = 'output window, operand 0, single buffered']
    %12 = vsyncpa [#allocation3], 0
    %13 = vsyncpa [#allocation4], 0
    // Predicated region
    $region2: #{_mlp_forward_impl.1} parent=1 // pred_check
      _
    $region3: #{_mlp_forward_impl.1} parent=1 // pred_check_branch
      %15 = sbr.rel (0) target = $region5
    $region4: #{_mlp_forward_impl.1} parent=1 // pred_region
      %s17 = ssub.s32 128, 128
      %18 = vsyncadd [#allocation3], %s17
      %s20 = sshll.u32 [#allocation2], 4
      %s21 = int_to_ptr.vmem [resolvable:$true] %s20
      %23 = dma.hbm_to_vmem [thread:$0]  %s0, 128, %s21, [#allocation3]
    $region5: #{_mlp_forward_impl.1} parent=1 // pred_fallthru
      _
    // Predicated region
    $region6: #{_mlp_forward_impl.1} parent=1 // pred_check
      _
    $region7: #{_mlp_forward_impl.1} parent=1 // pred_check_branch
      %25 = sbr.rel (0) target = $region9
    $region8: #{_mlp_forward_impl.1} parent=1 // pred_region
      _
    $region9: #{_mlp_forward_impl.1} parent=1 // pred_fallthru
      _
    // Predicated region
    $region10: #{_mlp_forward_impl.1} parent=1 // pred_check
      _
    $region11: #{_mlp_forward_impl.1} parent=1 // pred_check_branch
      %27 = sbr.rel (0) target = $region13
    $region12: #{_mlp_forward_impl.1} parent=1 // pred_region
      _
    $region13: #{_mlp_forward_impl.1} parent=1 // pred_fallthru
      _
    // Predicated region
    $region14: #{_mlp_forward_impl.1} parent=1 // pred_check
      _
    $region15: #{_mlp_forward_impl.1} parent=1 // pred_check_branch
      %29 = sbr.rel (0) target = $region17
    $region16: #{_mlp_forward_impl.1} parent=1 // pred_region
      _
    $region17: #{_mlp_forward_impl.1} parent=1 // pred_fallthru
      _
    // Predicated region
    $region18: #{_mlp_forward_impl.1} parent=1 // pred_check
      _
    $region19: #{_mlp_forward_impl.1} parent=1 // pred_check_branch
      %31 = sbr.rel (0) target = $region21
    $region20: #{_mlp_forward_impl.1} parent=1 // pred_region
      _
    $region21: #{_mlp_forward_impl.1} parent=1 // pred_fallthru
      _
    // Predicated region
    $region22: #{_mlp_forward_impl.1} parent=1 // pred_check
      _
    $region23: #{_mlp_forward_impl.1} parent=1 // pred_check_branch
      %33 = sbr.rel (0) target = $region25
    $region24: #{_mlp_forward_impl.1} parent=1 // pred_region
      _
    $region25: #{_mlp_forward_impl.1} parent=1 // pred_fallthru
      _
    // Predicated region
    $region26: #{_mlp_forward_impl.1} parent=1 // pred_check
      _
    $region27: #{_mlp_forward_impl.1} parent=1 // pred_check_branch
      %35 = sbr.rel (0) target = $region29
    $region28: #{_mlp_forward_impl.1} parent=1 // pred_region
      _
    $region29: #{_mlp_forward_impl.1} parent=1 // pred_fallthru
      _
    // Predicated region
    $region30: #{_mlp_forward_impl.1} parent=1 // pred_check
      _
    $region31: #{_mlp_forward_impl.1} parent=1 // pred_check_branch
      %37 = sbr.rel (0) target = $region33
    $region32: #{_mlp_forward_impl.1} parent=1 // pred_region
      %38 = dma.done [#allocation3], 128
    $region33: #{_mlp_forward_impl.1} parent=1 // pred_fallthru
      _
    %v40 = vld [vmem:[#allocation2] sm:$0xff]
    %v41 = vpack.c.bf16 %v40, %v40
    %v42 = vld [vmem:[%s1] sm:$0xf]
    %v43 = vld [vmem:[%s1 + $0x4] sm:$0xf]
    %v44 = vld [vmem:[%s1 + $0x8] sm:$0xf]
    %v45 = vld [vmem:[%s1 + $0xc] sm:$0xf]
    %v46 = vld [vmem:[%s2] sm:$0x1]
    %v48 = vlaneseq
    %v49 = vshrl.u32 %v48, 7
    %v50 = vsub.s32 0, %v49
    %v51 = vrot.slane %v46, %v50
    %v57 = vunpack.c.l.b16 %v42
    %v58 = vunpack.c.l.b16 %v43
    %v59 = vunpack.c.l.b16 %v44
    %v60 = vunpack.c.l.b16 %v45
    %v61 = vpack.c.b16 %v58, %v57
    %v62 = vpack.c.b16 %v60, %v59
    %vm65 = vcmask 261120
    %v67 = vsel %vm65, %v41, 0
    %69 = vmatprep.subr.bf16.mxu0 0
    %70 = vmatpush1.bf16.msra.mxu0 %v61
    %71 = vmatprep.subr.bf16.mxu0 0
    %72 = vmatpush1.bf16.msra.mxu0 %v62
    %73 = vmatprep.subr.bf16.mxu0 0
    %74 = vmatpush1.bf16.msra.mxu0 0
    %75 = vmatprep.subr.bf16.mxu0 0
    %76 = vmatpush1.bf16.msra.mxu0 0
    %77 = vmatprep.subr.bf16.mxu0 0
    %78 = vmatpush1.bf16.msra.mxu0 0
    %79 = vmatprep.subr.bf16.mxu0 0
    %80 = vmatpush1.bf16.msra.mxu0 0
    %81 = vmatprep.subr.bf16.mxu0 0
    %82 = vmatpush1.bf16.msra.mxu0 0
    %83 = vmatprep.subr.bf16.mxu0 0
    %84 = vmatpush1.bf16.msra.mxu0 0
    %85 = vmatprep.subr.bf16.mxu0 0
    %86 = vmatpush1.bf16.msra.mxu0 0
    %87 = vmatprep.subr.bf16.mxu0 0
    %88 = vmatpush1.bf16.msra.mxu0 0
    %89 = vmatprep.subr.bf16.mxu0 0
    %90 = vmatpush1.bf16.msra.mxu0 0
    %91 = vmatprep.subr.bf16.mxu0 0
    %92 = vmatpush1.bf16.msra.mxu0 0
    %93 = vmatprep.subr.bf16.mxu0 0
    %94 = vmatpush1.bf16.msra.mxu0 0
    %95 = vmatprep.subr.bf16.mxu0 0
    %96 = vmatpush1.bf16.msra.mxu0 0
    %97 = vmatprep.subr.bf16.mxu0 0
    %98 = vmatpush1.bf16.msra.mxu0 0
    %99 = vmatprep.subr.bf16.mxu0 0
    %100 = vmatpush1.bf16.msra.mxu0 0
    %101 = vmatprep.mubr.bf16.mxu0 0
    %102 = vmatmul.mubr.bf16.gmra.mrb[0].mxu0 %v67
    %v103 = vpop.f32.mrb[0].mxu0
    %v104 = vadd.f32 %v51, %v103
    %v105 = vpop.f32.mrb[0].mxu0
    %v106 = vpop.f32.mrb[0].mxu0
    %v107 = vpop.f32.mrb[0].mxu0
    %108 = vdwg.mxu0
    %v109 = vmax.f32 %v104, 0.0
    %v110 = vpack.c.bf16 %v109, %v109
    %v111 = vld [vmem:[%s3] sm:$0xf]
    %v112 = vld [vmem:[%s3 + $0x4] sm:$0xf]
    %v113 = vld [vmem:[%s3 + $0x8] sm:$0xf]
    %v114 = vld [vmem:[%s3 + $0xc] sm:$0xf]
    %v115 = vld [vmem:[%s3 + $0x10] sm:$0xf]
    %v116 = vld [vmem:[%s3 + $0x14] sm:$0xf]
    %v117 = vld [vmem:[%s3 + $0x18] sm:$0xf]
    %v118 = vld [vmem:[%s3 + $0x1c] sm:$0xf]
    %v119 = vld [vmem:[%s4] sm:$0x1]
    %v121 = vlaneseq
    %v122 = vshrl.u32 %v121, 7
    %v123 = vsub.s32 0, %v122
    %v124 = vrot.slane %v119, %v123
    %v134 = vunpack.c.l.b16 %v111
    %v135 = vunpack.c.l.b16 %v112
    %v136 = vunpack.c.l.b16 %v113
    %v137 = vunpack.c.l.b16 %v114
    %v138 = vunpack.c.l.b16 %v115
    %v139 = vunpack.c.l.b16 %v116
    %v140 = vunpack.c.l.b16 %v117
    %v141 = vunpack.c.l.b16 %v118
    %v142 = vpack.c.b16 %v135, %v134
    %v143 = vpack.c.b16 %v137, %v136
    %v144 = vpack.c.b16 %v139, %v138
    %v145 = vpack.c.b16 %v141, %v140
    %vm150 = vcmask 523264
    %v152 = vsel %vm150, %v110, 0
    %154 = vmatprep.subr.bf16.mxu0 0
    %155 = vmatpush1.bf16.msra.mxu0 %v142
    %156 = vmatprep.subr.bf16.mxu0 0
    %157 = vmatpush1.bf16.msra.mxu0 %v143
    %158 = vmatprep.subr.bf16.mxu0 0
    %159 = vmatpush1.bf16.msra.mxu0 %v144
    %160 = vmatprep.subr.bf16.mxu0 0
    %161 = vmatpush1.bf16.msra.mxu0 %v145
    %162 = vmatprep.subr.bf16.mxu0 0
    %163 = vmatpush1.bf16.msra.mxu0 0
    %164 = vmatprep.subr.bf16.mxu0 0
    %165 = vmatpush1.bf16.msra.mxu0 0
    %166 = vmatprep.subr.bf16.mxu0 0
    %167 = vmatpush1.bf16.msra.mxu0 0
    %168 = vmatprep.subr.bf16.mxu0 0
    %169 = vmatpush1.bf16.msra.mxu0 0
    %170 = vmatprep.subr.bf16.mxu0 0
    %171 = vmatpush1.bf16.msra.mxu0 0
    %172 = vmatprep.subr.bf16.mxu0 0
    %173 = vmatpush1.bf16.msra.mxu0 0
    %174 = vmatprep.subr.bf16.mxu0 0
    %175 = vmatpush1.bf16.msra.mxu0 0
    %176 = vmatprep.subr.bf16.mxu0 0
    %177 = vmatpush1.bf16.msra.mxu0 0
    %178 = vmatprep.subr.bf16.mxu0 0
    %179 = vmatpush1.bf16.msra.mxu0 0
    %180 = vmatprep.subr.bf16.mxu0 0
    %181 = vmatpush1.bf16.msra.mxu0 0
    %182 = vmatprep.subr.bf16.mxu0 0
    %183 = vmatpush1.bf16.msra.mxu0 0
    %184 = vmatprep.subr.bf16.mxu0 0
    %185 = vmatpush1.bf16.msra.mxu0 0
    %186 = vmatprep.mubr.bf16.mxu0 0
    %187 = vmatmul.mubr.bf16.gmra.mrb[0].mxu0 %v152
    %v188 = vpop.f32.mrb[0].mxu0
    %v189 = vadd.f32 %v124, %v188
    %v190 = vpop.f32.mrb[0].mxu0
    %v191 = vpop.f32.mrb[0].mxu0
    %v192 = vpop.f32.mrb[0].mxu0
    %193 = vdwg.mxu0
    %v194 = vmax.f32 %v189, 0.0
    %v195 = vpack.c.bf16 %v194, %v194
    %v196 = vld [vmem:[%s5] sm:$0xf]
    %v197 = vld [vmem:[%s5 + $0x4] sm:$0xf]
    %v198 = vld [vmem:[%s5 + $0x8] sm:$0xf]
    %v199 = vld [vmem:[%s5 + $0xc] sm:$0xf]
    %v200 = vld [vmem:[%s5 + $0x10] sm:$0xf]
    %v201 = vld [vmem:[%s5 + $0x14] sm:$0xf]
    %v202 = vld [vmem:[%s5 + $0x18] sm:$0xf]
    %v203 = vld [vmem:[%s5 + $0x1c] sm:$0xf]
    %v204 = vld [vmem:[%s6] sm:$0x1]
    %v206 = vlaneseq
    %v207 = vshrl.u32 %v206, 7
    %v208 = vsub.s32 0, %v207
    %v209 = vrot.slane %v204, %v208
    %v219 = vunpack.c.l.b16 %v196
    %v220 = vunpack.c.l.b16 %v197
    %v221 = vunpack.c.l.b16 %v198
    %v222 = vunpack.c.l.b16 %v199
    %v223 = vunpack.c.l.b16 %v200
    %v224 = vunpack.c.l.b16 %v201
    %v225 = vunpack.c.l.b16 %v202
    %v226 = vunpack.c.l.b16 %v203
    %v227 = vpack.c.b16 %v220, %v219
    %v228 = vpack.c.b16 %v222, %v221
    %v229 = vpack.c.b16 %v224, %v223
    %v230 = vpack.c.b16 %v226, %v225
    %v236 = vsel %vm150, %v195, 0
    %238 = vmatprep.subr.bf16.mxu0 0
    %239 = vmatpush1.bf16.msra.mxu0 %v227
    %240 = vmatprep.subr.bf16.mxu0 0
    %241 = vmatpush1.bf16.msra.mxu0 %v228
    %242 = vmatprep.subr.bf16.mxu0 0
    %243 = vmatpush1.bf16.msra.mxu0 %v229
    %244 = vmatprep.subr.bf16.mxu0 0
    %245 = vmatpush1.bf16.msra.mxu0 %v230
    %246 = vmatprep.subr.bf16.mxu0 0
    %247 = vmatpush1.bf16.msra.mxu0 0
    %248 = vmatprep.subr.bf16.mxu0 0
    %249 = vmatpush1.bf16.msra.mxu0 0
    %250 = vmatprep.subr.bf16.mxu0 0
    %251 = vmatpush1.bf16.msra.mxu0 0
    %252 = vmatprep.subr.bf16.mxu0 0
    %253 = vmatpush1.bf16.msra.mxu0 0
    %254 = vmatprep.subr.bf16.mxu0 0
    %255 = vmatpush1.bf16.msra.mxu0 0
    %256 = vmatprep.subr.bf16.mxu0 0
    %257 = vmatpush1.bf16.msra.mxu0 0
    %258 = vmatprep.subr.bf16.mxu0 0
    %259 = vmatpush1.bf16.msra.mxu0 0
    %260 = vmatprep.subr.bf16.mxu0 0
    %261 = vmatpush1.bf16.msra.mxu0 0
    %262 = vmatprep.subr.bf16.mxu0 0
    %263 = vmatpush1.bf16.msra.mxu0 0
    %264 = vmatprep.subr.bf16.mxu0 0
    %265 = vmatpush1.bf16.msra.mxu0 0
    %266 = vmatprep.subr.bf16.mxu0 0
    %267 = vmatpush1.bf16.msra.mxu0 0
    %268 = vmatprep.subr.bf16.mxu0 0
    %269 = vmatpush1.bf16.msra.mxu0 0
    %270 = vmatprep.mubr.bf16.mxu0 0
    %271 = vmatmul.mubr.bf16.gmra.mrb[0].mxu0 %v236
    %v272 = vpop.f32.mrb[0].mxu0
    %v273 = vadd.f32 %v209, %v272
    %v274 = vpop.f32.mrb[0].mxu0
    %v275 = vpop.f32.mrb[0].mxu0
    %v276 = vpop.f32.mrb[0].mxu0
    %277 = vdwg.mxu0
    %vm278 = vcmask 130048
    %279 = vst.msk [vmem:[#allocation5] sm:$0xff] %vm278, %v273
    // Predicated region
    $region34: #{_mlp_forward_impl.1} parent=1 // pred_check
      _
    $region35: #{_mlp_forward_impl.1} parent=1 // pred_check_branch
      %281 = sbr.rel (0) target = $region37
    $region36: #{_mlp_forward_impl.1} parent=1 // pred_region
      %s283 = ssub.s32 128, 128
      %284 = vsyncadd [#allocation4], %s283
      %s286 = sshll.u32 [#allocation5], 4
      %s287 = int_to_ptr.vmem [resolvable:$true] %s286
      %289 = dma.vmem_to_hbm [thread:$0]  %s287, 128, %s7, [#allocation4]
    $region37: #{_mlp_forward_impl.1} parent=1 // pred_fallthru
      _
    // Predicated region
    $region38: #{_mlp_forward_impl.1} parent=1 // pred_check
      _
    $region39: #{_mlp_forward_impl.1} parent=1 // pred_check_branch
      %291 = sbr.rel (0) target = $region41
    $region40: #{_mlp_forward_impl.1} parent=1 // pred_region
      %292 = dma.done [#allocation4], 128
    $region41: #{_mlp_forward_impl.1} parent=1 // pred_fallthru
      _
    %293 = vsyncpa [#allocation3], 1
    %294 = vsyncpa [#allocation4], 1

</llo_original>
